<compile_context>
chip_gen: v7x
topology: tpu7x:2x2x1
jax: 0.10.0
libtpu: 0.0.40
codegen_flags: <defaults>
</compile_context>

<pallas_src>
import math

import jax
import jax.numpy as jnp
from jax.experimental import pallas as pl
from jax.experimental.pallas import tpu as pltpu

HIDDEN = 256          # fixed by the module (nn.Linear(len_s, 256))
LANE = 128            # TPU lane granule
SUBLANE = 8           # TPU sublane granule
HALF_LOG_2PI = 0.5 * math.log(2.0 * math.pi)


def _round_up(n, m):
    return ((n + m - 1) // m) * m


def policy_kernel(state_ref, eps_ref, w1_ref, b1_ref, wh_ref, bh_ref,
                  act_ref, lp_ref):
    # fc1 (transposed): h1^T = relu(W1^T @ state^T + b1)   -> (HIDDEN, tb)
    h1 = jnp.dot(w1_ref[...], state_ref[...], preferred_element_type=jnp.float32)
    h1 = jnp.maximum(h1 + b1_ref[...], 0.0)

    # fused head (one MXU pass): rows [0:hp) are the mu projection, rows
    # [hp:2hp) the pre-softplus std logits; hp = len_a rounded up to a sublane
    # group so both slices below start at 8-aligned sublane offsets.
    head = jnp.dot(wh_ref[...], h1, preferred_element_type=jnp.float32) + bh_ref[...]
    hp = head.shape[0] // 2
    la = act_ref.shape[0]                 # real action rows (len_a)

    mu = head[:la, :]                     # (len_a, tb), lane-dense
    z = head[hp:hp + la, :]               # (len_a, tb), 8-aligned offset

    # softplus, numerically stable: max(z,0) + log1p(exp(-|z|))
    std = jnp.maximum(z, 0.0) + jnp.log1p(jnp.exp(-jnp.abs(z)))

    eps = eps_ref[...]
    x = mu + std * eps                    # reparameterized sample

    # Normal(mu, std).log_prob(x); since (x - mu)/std == eps this simplifies
    lp = -0.5 * eps * eps - jnp.log(std) - jnp.float32(HALF_LOG_2PI)

    # tanh squashing + correction (matches reference exactly, incl. 1e-7 floor)
    t = jnp.tanh(x)
    lp = lp - jnp.log(1.0 - t * t + 1e-7)

    # narrow lane-dense stores (batch on lanes)
    act_ref[...] = t
    lp_ref[...] = lp


def policy_forward(state, eps, params, *, batch_tile=1024):
    """state: (B, len_s) f32, eps: (B, len_a) f32, params: dict of weights.

    Returns (action, log_prob), each (B, len_a) f32.
    """
    B, len_s = state.shape
    len_a = eps.shape[1]
    f32 = jnp.float32
    hp = _round_up(len_a, SUBLANE)        # per-head sublane padding

    # Transposed streaming layout: batch on the lane axis. The tiny transposes
    # are wrapper-side layout plumbing over (B, <=len_s) data; no zero-padded
    # copies of the streamed tensors are materialized.
    state_t = state.astype(f32).T                        # (len_s, B)
    eps_t = eps.astype(f32).T                            # (len_a, B)

    w1_t = params["w1"].astype(f32).T                    # (HIDDEN, len_s)
    b1_t = params["b1"].astype(f32).reshape(HIDDEN, 1)   # (HIDDEN, 1)
    wh_t = jnp.zeros((2 * hp, HIDDEN), f32)
    wh_t = wh_t.at[:len_a, :].set(params["wmu"].astype(f32).T)
    wh_t = wh_t.at[hp:hp + len_a, :].set(params["wstd"].astype(f32).T)
    bh_t = jnp.zeros((2 * hp, 1), f32)
    bh_t = bh_t.at[:len_a, 0].set(params["bmu"].astype(f32).reshape(-1))
    bh_t = bh_t.at[hp:hp + len_a, 0].set(params["bstd"].astype(f32).reshape(-1))

    # Batch tiling (lane granule 128). Guarantee >= 2 tiles whenever B allows
    # so the "parallel" axis spans v7x's two TensorCores and the activation
    # streams pipeline. No batch padding is materialized: grid = cdiv and the
    # partial last block's OOB lanes are masked by Pallas (columns are
    # independent, so garbage lanes never contaminate real outputs).
    if B <= LANE:
        tb = B                                           # single full-dim block
    else:
        bt = max(LANE, _round_up(batch_tile, LANE))
        tb = min(bt, _round_up(pl.cdiv(B, 2), LANE))
    nb = pl.cdiv(B, tb)

    # VMEM limit sized from the actual chip (64 MiB cap on 128-MiB v5e/v6e,
    # half of physical on v7x's 64 MiB); usage here is only a few MiB anyway.
    try:
        vmem_limit = min(64 * 1024 * 1024,
                         int(pltpu.get_tpu_info().vmem_capacity_bytes) // 2)
    except Exception:
        vmem_limit = 32 * 1024 * 1024

    # advisory cost estimate so XLA can overlap this micro-kernel with neighbors
    flops = 2 * B * HIDDEN * (len_s + 2 * hp)
    transcendentals = 5 * B * len_a                      # exp, log1p, log, tanh, log
    bytes_accessed = 4 * (state_t.size + eps_t.size + w1_t.size + b1_t.size
                          + wh_t.size + bh_t.size + 2 * len_a * B)

    act_t, lp_t = pl.pallas_call(
        policy_kernel,
        out_shape=(jax.ShapeDtypeStruct((len_a, B), f32),
                   jax.ShapeDtypeStruct((len_a, B), f32)),
        grid_spec=pltpu.PrefetchScalarGridSpec(
            num_scalar_prefetch=0,
            grid=(nb,),
            in_specs=[
                pl.BlockSpec((len_s, tb), lambda i: (0, i)),       # state^T (streamed)
                pl.BlockSpec((len_a, tb), lambda i: (0, i)),       # eps^T   (streamed)
                pl.BlockSpec((HIDDEN, len_s), lambda i: (0, 0)),   # W1^T  (VMEM-resident)
                pl.BlockSpec((HIDDEN, 1), lambda i: (0, 0)),       # b1
                pl.BlockSpec((2 * hp, HIDDEN), lambda i: (0, 0)),  # fused head W^T
                pl.BlockSpec((2 * hp, 1), lambda i: (0, 0)),       # fused head b
            ],
            out_specs=(pl.BlockSpec((len_a, tb), lambda i: (0, i)),
                       pl.BlockSpec((len_a, tb), lambda i: (0, i))),
        ),
        compiler_params=pltpu.CompilerParams(
            dimension_semantics=("parallel",),           # megacore-shard batch on v7x
            vmem_limit_bytes=vmem_limit,
        ),
        cost_estimate=pl.CostEstimate(
            flops=flops,
            transcendentals=transcendentals,
            bytes_accessed=bytes_accessed,
        ),
    )(state_t, eps_t, w1_t, b1_t, wh_t, bh_t)

    return act_t.T, lp_t.T


def init_params(key, len_s, len_a):
    """Deterministic synthetic init mimicking nn.Linear default (uniform)."""
    ks = jax.random.split(key, 6)

    def linear(kw, kb, fan_in, fan_out):
        bound = 1.0 / math.sqrt(fan_in)
        # stored as (fan_in, fan_out) so the reference does x @ W
        w = jax.random.uniform(kw, (fan_in, fan_out), jnp.float32, -bound, bound)
        b = jax.random.uniform(kb, (1, fan_out), jnp.float32, -bound, bound)
        return w, b

    w1, b1 = linear(ks[0], ks[1], len_s, HIDDEN)
    wmu, bmu = linear(ks[2], ks[3], HIDDEN, len_a)
    wstd, bstd = linear(ks[4], ks[5], HIDDEN, len_a)
    return dict(w1=w1, b1=b1, wmu=wmu, bmu=bmu, wstd=wstd, bstd=bstd)


def reference_forward(state, eps, p):
    """Pure-JAX reference for a sanity check."""
    h1 = jax.nn.relu(state @ p["w1"] + p["b1"])
    mu = h1 @ p["wmu"] + p["bmu"]
    std = jax.nn.softplus(h1 @ p["wstd"] + p["bstd"])
    x = mu + std * eps
    lp = -0.5 * eps * eps - jnp.log(std) - 0.5 * math.log(2.0 * math.pi)
    t = jnp.tanh(x)
    lp = lp - jnp.log(1.0 - t * t + 1e-7)
    return t, lp


if __name__ == "__main__":
    key = jax.random.PRNGKey(0)
    k_state, k_eps, k_param, k_state2, k_eps2 = jax.random.split(key, 5)

    B, LEN_S, LEN_A = 8, 32, 4  # small SAC-style state/action dims
    params = init_params(k_param, LEN_S, LEN_A)

    # --- small-shape check (single grid step, tb == B) ---
    state = jax.random.normal(k_state, (B, LEN_S), jnp.float32)
    eps = jax.random.normal(k_eps, (B, LEN_A), jnp.float32)  # rsample noise
    action, log_prob = policy_forward(state, eps, params)
    jax.block_until_ready((action, log_prob))

    ref_a, ref_lp = reference_forward(state, eps, params)
    assert action.shape == (B, LEN_A) and log_prob.shape == (B, LEN_A)
    assert jnp.allclose(action, ref_a, atol=1e-5, rtol=1e-5)
    assert jnp.allclose(log_prob, ref_lp, atol=1e-4, rtol=1e-4)

    # --- multi-tile grid + masked partial last block (B not a tile multiple) ---
    B2 = 300
    state2 = jax.random.normal(k_state2, (B2, LEN_S), jnp.float32)
    eps2 = jax.random.normal(k_eps2, (B2, LEN_A), jnp.float32)
    a2, lp2 = policy_forward(state2, eps2, params)   # tb=256 -> grid=(2,)
    jax.block_until_ready((a2, lp2))

    ref_a2, ref_lp2 = reference_forward(state2, eps2, params)
    assert a2.shape == (B2, LEN_A) and lp2.shape == (B2, LEN_A)
    assert jnp.allclose(a2, ref_a2, atol=1e-5, rtol=1e-5)
    assert jnp.allclose(lp2, ref_lp2, atol=1e-4, rtol=1e-4)

    print("KERNEL_OK")
</pallas_src>

<mosaic_0001>
module attributes {stable_mosaic.version = 11 : i64} {
  func.func @policy_kernel(%arg0: i32, %arg1: memref<32x8xf32, #tpu.memory_space<vmem>>, %arg2: memref<4x8xf32, #tpu.memory_space<vmem>>, %arg3: memref<256x32xf32, #tpu.memory_space<vmem>>, %arg4: memref<256x1xf32, #tpu.memory_space<vmem>>, %arg5: memref<16x256xf32, #tpu.memory_space<vmem>>, %arg6: memref<16x1xf32, #tpu.memory_space<vmem>>, %arg7: memref<4x8xf32, #tpu.memory_space<vmem>>, %arg8: memref<4x8xf32, #tpu.memory_space<vmem>>) attributes {dimension_semantics = [#tpu.dimension_semantics<parallel>], iteration_bounds = array<i64: 1>, scalar_prefetch = 0 : i64, scratch_operands = 0 : i64, tpu.core_type = #tpu.core_type<tc>, window_params = [{transform_indices = @transform_0, window_bounds = array<i64: 32, 8>}, {transform_indices = @transform_1, window_bounds = array<i64: 4, 8>}, {pipeline_mode = #tpu.pipeline_mode<synchronous>, transform_indices = @transform_2, window_bounds = array<i64: 256, 32>}, {pipeline_mode = #tpu.pipeline_mode<synchronous>, transform_indices = @transform_3, window_bounds = array<i64: 256, 1>}, {pipeline_mode = #tpu.pipeline_mode<synchronous>, transform_indices = @transform_4, window_bounds = array<i64: 16, 256>}, {pipeline_mode = #tpu.pipeline_mode<synchronous>, transform_indices = @transform_5, window_bounds = array<i64: 16, 1>}, {transform_indices = @transform_6, window_bounds = array<i64: 4, 8>}, {transform_indices = @transform_7, window_bounds = array<i64: 4, 8>}]} {
    %c0 = arith.constant 0 : index
    %c0_0 = arith.constant 0 : index
    %0 = vector.load %arg3[%c0, %c0_0] : memref<256x32xf32, #tpu.memory_space<vmem>>, vector<256x32xf32>
    %c0_1 = arith.constant 0 : index
    %c0_2 = arith.constant 0 : index
    %1 = vector.load %arg1[%c0_1, %c0_2] : memref<32x8xf32, #tpu.memory_space<vmem>>, vector<32x8xf32>
    %cst = arith.constant dense<0.000000e+00> : vector<256x8xf32>
    %2 = tpu.matmul %0, %1, %cst {dimension_numbers = #tpu.dot_dimension_numbers<[1], [0], [0], [1], [0, 0, 1, 1], [], []>} : vector<256x32xf32>, vector<32x8xf32>, vector<256x8xf32> -> vector<256x8xf32>
    %c0_3 = arith.constant 0 : index
    %c0_4 = arith.constant 0 : index
    %3 = vector.load %arg4[%c0_3, %c0_4] : memref<256x1xf32, #tpu.memory_space<vmem>>, vector<256x1xf32>
    %4 = vector.broadcast %3 : vector<256x1xf32> to vector<256x8xf32>
    %5 = arith.addf %2, %4 : vector<256x8xf32>
    %cst_5 = arith.constant 0.000000e+00 : f32
    %6 = vector.broadcast %cst_5 : f32 to vector<256x8xf32>
    %7 = arith.maximumf %5, %6 : vector<256x8xf32>
    %c0_6 = arith.constant 0 : index
    %c0_7 = arith.constant 0 : index
    %8 = vector.load %arg5[%c0_6, %c0_7] : memref<16x256xf32, #tpu.memory_space<vmem>>, vector<16x256xf32>
    %cst_8 = arith.constant dense<0.000000e+00> : vector<16x8xf32>
    %9 = tpu.matmul %8, %7, %cst_8 {dimension_numbers = #tpu.dot_dimension_numbers<[1], [0], [0], [1], [0, 0, 1, 1], [], []>} : vector<16x256xf32>, vector<256x8xf32>, vector<16x8xf32> -> vector<16x8xf32>
    %c0_9 = arith.constant 0 : index
    %c0_10 = arith.constant 0 : index
    %10 = vector.load %arg6[%c0_9, %c0_10] : memref<16x1xf32, #tpu.memory_space<vmem>>, vector<16x1xf32>
    %11 = vector.broadcast %10 : vector<16x1xf32> to vector<16x8xf32>
    %12 = arith.addf %9, %11 : vector<16x8xf32>
    %13 = vector.extract_strided_slice %12 {offsets = [0, 0], sizes = [4, 8], strides = [1, 1]} : vector<16x8xf32> to vector<4x8xf32>
    %14 = vector.extract_strided_slice %12 {offsets = [8, 0], sizes = [4, 8], strides = [1, 1]} : vector<16x8xf32> to vector<4x8xf32>
    %cst_11 = arith.constant 0.000000e+00 : f32
    %15 = vector.broadcast %cst_11 : f32 to vector<4x8xf32>
    %16 = arith.maximumf %14, %15 : vector<4x8xf32>
    %17 = math.absf %14 : vector<4x8xf32>
    %cst_12 = arith.constant 0.000000e+00 : f32
    %18 = vector.broadcast %cst_12 : f32 to vector<4x8xf32>
    %19 = arith.subf %18, %17 : vector<4x8xf32>
    %20 = math.exp %19 : vector<4x8xf32>
    %21 = math.log1p %20 : vector<4x8xf32>
    %22 = arith.addf %16, %21 : vector<4x8xf32>
    %c0_13 = arith.constant 0 : index
    %c0_14 = arith.constant 0 : index
    %23 = vector.load %arg2[%c0_13, %c0_14] : memref<4x8xf32, #tpu.memory_space<vmem>>, vector<4x8xf32>
    %24 = arith.mulf %22, %23 : vector<4x8xf32>
    %25 = arith.addf %13, %24 : vector<4x8xf32>
    %cst_15 = arith.constant -5.000000e-01 : f32
    %26 = vector.broadcast %cst_15 : f32 to vector<4x8xf32>
    %27 = arith.mulf %26, %23 : vector<4x8xf32>
    %28 = arith.mulf %27, %23 : vector<4x8xf32>
    %29 = math.log %22 : vector<4x8xf32>
    %30 = arith.subf %28, %29 : vector<4x8xf32>
    %cst_16 = arith.constant 0.918938517 : f32
    %31 = vector.broadcast %cst_16 : f32 to vector<4x8xf32>
    %32 = arith.subf %30, %31 : vector<4x8xf32>
    %33 = math.tanh %25 : vector<4x8xf32>
    %34 = arith.mulf %33, %33 : vector<4x8xf32>
    %cst_17 = arith.constant 1.000000e+00 : f32
    %35 = vector.broadcast %cst_17 : f32 to vector<4x8xf32>
    %36 = arith.subf %35, %34 : vector<4x8xf32>
    %cst_18 = arith.constant 1.000000e-07 : f32
    %37 = vector.broadcast %cst_18 : f32 to vector<4x8xf32>
    %38 = arith.addf %36, %37 : vector<4x8xf32>
    %39 = math.log %38 : vector<4x8xf32>
    %40 = arith.subf %32, %39 : vector<4x8xf32>
    %c0_19 = arith.constant 0 : index
    %c0_20 = arith.constant 0 : index
    %41 = vector.load %arg7[%c0_19, %c0_20] : memref<4x8xf32, #tpu.memory_space<vmem>>, vector<4x8xf32>
    tpu.vector_store %arg7[%c0_19, %c0_20], %33 {strides = array<i32>} : memref<4x8xf32, #tpu.memory_space<vmem>>, vector<4x8xf32>,
    %c0_21 = arith.constant 0 : index
    %c0_22 = arith.constant 0 : index
    %42 = vector.load %arg8[%c0_21, %c0_22] : memref<4x8xf32, #tpu.memory_space<vmem>>, vector<4x8xf32>
    tpu.vector_store %arg8[%c0_21, %c0_22], %40 {strides = array<i32>} : memref<4x8xf32, #tpu.memory_space<vmem>>, vector<4x8xf32>,
    return
  }
  func.func @transform_0(%arg0: i32) -> (i32, i32) {
    %c0_i32 = arith.constant 0 : i32
    %c0_i32_0 = arith.constant 0 : i32
    return %c0_i32, %arg0 : i32, i32
  }
  func.func @transform_1(%arg0: i32) -> (i32, i32) {
    %c0_i32 = arith.constant 0 : i32
    %c0_i32_0 = arith.constant 0 : i32
    return %c0_i32, %arg0 : i32, i32
  }
  func.func @transform_2(%arg0: i32) -> (i32, i32) {
    %c0_i32 = arith.constant 0 : i32
    %c0_i32_0 = arith.constant 0 : i32
    %c0_i32_1 = arith.constant 0 : i32
    return %c0_i32, %c0_i32_0 : i32, i32
  }
  func.func @transform_3(%arg0: i32) -> (i32, i32) {
    %c0_i32 = arith.constant 0 : i32
    %c0_i32_0 = arith.constant 0 : i32
    %c0_i32_1 = arith.constant 0 : i32
    return %c0_i32, %c0_i32_0 : i32, i32
  }
  func.func @transform_4(%arg0: i32) -> (i32, i32) {
    %c0_i32 = arith.constant 0 : i32
    %c0_i32_0 = arith.constant 0 : i32
    %c0_i32_1 = arith.constant 0 : i32
    return %c0_i32, %c0_i32_0 : i32, i32
  }
  func.func @transform_5(%arg0: i32) -> (i32, i32) {
    %c0_i32 = arith.constant 0 : i32
    %c0_i32_0 = arith.constant 0 : i32
    %c0_i32_1 = arith.constant 0 : i32
    return %c0_i32, %c0_i32_0 : i32, i32
  }
  func.func @transform_6(%arg0: i32) -> (i32, i32) {
    %c0_i32 = arith.constant 0 : i32
    %c0_i32_0 = arith.constant 0 : i32
    return %c0_i32, %arg0 : i32, i32
  }
  func.func @transform_7(%arg0: i32) -> (i32, i32) {
    %c0_i32 = arith.constant 0 : i32
    %c0_i32_0 = arith.constant 0 : i32
    return %c0_i32, %arg0 : i32, i32
  }
}

</mosaic_0001>

<llo_original>
// kernel: tpu_custom_call.1
$region0: #{tpu_custom_call.1}
  #allocation0 [shape = 'u32[]', space=smem, size = 0x4, offset = 0x4, fixed_abs, tag = 'smem constant byte address 0x4 - core index']
  #allocation1 [shape = 'u32[144,128]{1,0:T(1,128)}', space=vmem, size = 0x12000, scoped, tag = 'internal scratch']
  %s0 = inlined_call_operand.vmem [shape: f32[32,8], index: 0, kind: input, shape index: {}]
  %s1 = inlined_call_operand.vmem [shape: f32[4,8], index: 1, kind: input, shape index: {}]
  %s2 = inlined_call_operand.vmem [shape: f32[256,32], index: 2, kind: input, shape index: {}]
  %s3 = inlined_call_operand.vmem [shape: f32[256,1], index: 3, kind: input, shape index: {}]
  %s4 = inlined_call_operand.vmem [shape: f32[16,256], index: 4, kind: input, shape index: {}]
  %s5 = inlined_call_operand.vmem [shape: f32[16,1], index: 5, kind: input, shape index: {}]
  %s6 = inlined_call_operand.hbm [shape: f32[4,8], index: 6, kind: output, shape index: {0}]
  %s7 = inlined_call_operand.hbm [shape: f32[4,8], index: 7, kind: output, shape index: {1}]
  %8 = xla_tuple %s6, %s7
  %s9 = sld [smem:[#allocation0]]
  $region42: #{tpu_custom_call.1} parent=0
    _
  %s11 = ssub.s32 1, %s9
  %s12 = scalar_select 0, %s11, %s9
  $region1: #{tpu_custom_call.1} parent=0
    #allocation2 [shape = 'u8[2048]{0}', space=vmem, size = 0x800, scoped, tag = 'output window, operand 0, single buffered']
    #allocation3 [shape = 's32[1]{0}', space=sflag, size = 0x4, scoped, tag = 'scoped memory for tpu_custom_call.1']
    #allocation4 [shape = 'u8[2048]{0}', space=vmem, size = 0x800, scoped, tag = 'output window, operand 1, single buffered']
    #allocation5 [shape = 's32[1]{0}', space=sflag, size = 0x4, scoped, tag = 'scoped memory for tpu_custom_call.1']
    %13 = vsyncpa [#allocation3], 0
    %14 = vsyncpa [#allocation5], 0
    // Predicated region
    $region2: #{tpu_custom_call.1} parent=1 // pred_check
      _
    $region3: #{tpu_custom_call.1} parent=1 // pred_check_branch
      %16 = sbr.rel (0) target = $region5
    $region4: #{tpu_custom_call.1} parent=1 // pred_region
      _
    $region5: #{tpu_custom_call.1} parent=1 // pred_fallthru
      _
    // Predicated region
    $region6: #{tpu_custom_call.1} parent=1 // pred_check
      _
    $region7: #{tpu_custom_call.1} parent=1 // pred_check_branch
      %18 = sbr.rel (0) target = $region9
    $region8: #{tpu_custom_call.1} parent=1 // pred_region
      _
    $region9: #{tpu_custom_call.1} parent=1 // pred_fallthru
      _
    // Predicated region
    $region10: #{tpu_custom_call.1} parent=1 // pred_check
      _
    $region11: #{tpu_custom_call.1} parent=1 // pred_check_branch
      %20 = sbr.rel (0) target = $region13
    $region12: #{tpu_custom_call.1} parent=1 // pred_region
      _
    $region13: #{tpu_custom_call.1} parent=1 // pred_fallthru
      _
    // Predicated region
    $region14: #{tpu_custom_call.1} parent=1 // pred_check
      _
    $region15: #{tpu_custom_call.1} parent=1 // pred_check_branch
      %22 = sbr.rel (0) target = $region17
    $region16: #{tpu_custom_call.1} parent=1 // pred_region
      _
    $region17: #{tpu_custom_call.1} parent=1 // pred_fallthru
      _
    // Predicated region
    $region18: #{tpu_custom_call.1} parent=1 // pred_check
      _
    $region19: #{tpu_custom_call.1} parent=1 // pred_check_branch
      %24 = sbr.rel (0) target = $region21
    $region20: #{tpu_custom_call.1} parent=1 // pred_region
      _
    $region21: #{tpu_custom_call.1} parent=1 // pred_fallthru
      _
    // Predicated region
    $region22: #{tpu_custom_call.1} parent=1 // pred_check
      _
    $region23: #{tpu_custom_call.1} parent=1 // pred_check_branch
      %26 = sbr.rel (0) target = $region25
    $region24: #{tpu_custom_call.1} parent=1 // pred_region
      _
    $region25: #{tpu_custom_call.1} parent=1 // pred_fallthru
      _
    %v27 = vld [vmem:[%s2] sm:$0xff]
    %v28 = vld [vmem:[%s2 + $0x8] sm:$0xff]
    %v29 = vld [vmem:[%s2 + $0x10] sm:$0xff]
    %v30 = vld [vmem:[%s2 + $0x18] sm:$0xff]
    %v31 = vld [vmem:[%s2 + $0x20] sm:$0xff]
    %v32 = vld [vmem:[%s2 + $0x28] sm:$0xff]
    %v33 = vld [vmem:[%s2 + $0x30] sm:$0xff]
    %v34 = vld [vmem:[%s2 + $0x38] sm:$0xff]
    %v35 = vld [vmem:[%s2 + $0x40] sm:$0xff]
    %v36 = vld [vmem:[%s2 + $0x48] sm:$0xff]
    %v37 = vld [vmem:[%s2 + $0x50] sm:$0xff]
    %v38 = vld [vmem:[%s2 + $0x58] sm:$0xff]
    %v39 = vld [vmem:[%s2 + $0x60] sm:$0xff]
    %v40 = vld [vmem:[%s2 + $0x68] sm:$0xff]
    %v41 = vld [vmem:[%s2 + $0x70] sm:$0xff]
    %v42 = vld [vmem:[%s2 + $0x78] sm:$0xff]
    %v43 = vld [vmem:[%s2 + $0x80] sm:$0xff]
    %v44 = vld [vmem:[%s2 + $0x88] sm:$0xff]
    %v45 = vld [vmem:[%s2 + $0x90] sm:$0xff]
    %v46 = vld [vmem:[%s2 + $0x98] sm:$0xff]
    %v47 = vld [vmem:[%s2 + $0xa0] sm:$0xff]
    %v48 = vld [vmem:[%s2 + $0xa8] sm:$0xff]
    %v49 = vld [vmem:[%s2 + $0xb0] sm:$0xff]
    %v50 = vld [vmem:[%s2 + $0xb8] sm:$0xff]
    %v51 = vld [vmem:[%s2 + $0xc0] sm:$0xff]
    %v52 = vld [vmem:[%s2 + $0xc8] sm:$0xff]
    %v53 = vld [vmem:[%s2 + $0xd0] sm:$0xff]
    %v54 = vld [vmem:[%s2 + $0xd8] sm:$0xff]
    %v55 = vld [vmem:[%s2 + $0xe0] sm:$0xff]
    %v56 = vld [vmem:[%s2 + $0xe8] sm:$0xff]
    %v57 = vld [vmem:[%s2 + $0xf0] sm:$0xff]
    %v58 = vld [vmem:[%s2 + $0xf8] sm:$0xff]
    %v59 = vld [vmem:[%s0] sm:$0xff]
    %v60 = vld [vmem:[%s0 + $0x8] sm:$0xff]
    %v61 = vld [vmem:[%s0 + $0x10] sm:$0xff]
    %v62 = vld [vmem:[%s0 + $0x18] sm:$0xff]
    %v63 = vld [vmem:[%s3] sm:$0xff]
    %v64 = vld [vmem:[%s3 + $0x8] sm:$0xff]
    %v65 = vld [vmem:[%s3 + $0x10] sm:$0xff]
    %v66 = vld [vmem:[%s3 + $0x18] sm:$0xff]
    %v67 = vld [vmem:[%s3 + $0x20] sm:$0xff]
    %v68 = vld [vmem:[%s3 + $0x28] sm:$0xff]
    %v69 = vld [vmem:[%s3 + $0x30] sm:$0xff]
    %v70 = vld [vmem:[%s3 + $0x38] sm:$0xff]
    %v71 = vld [vmem:[%s3 + $0x40] sm:$0xff]
    %v72 = vld [vmem:[%s3 + $0x48] sm:$0xff]
    %v73 = vld [vmem:[%s3 + $0x50] sm:$0xff]
    %v74 = vld [vmem:[%s3 + $0x58] sm:$0xff]
    %v75 = vld [vmem:[%s3 + $0x60] sm:$0xff]
    %v76 = vld [vmem:[%s3 + $0x68] sm:$0xff]
    %v77 = vld [vmem:[%s3 + $0x70] sm:$0xff]
    %v78 = vld [vmem:[%s3 + $0x78] sm:$0xff]
    %v79 = vld [vmem:[%s3 + $0x80] sm:$0xff]
    %v80 = vld [vmem:[%s3 + $0x88] sm:$0xff]
    %v81 = vld [vmem:[%s3 + $0x90] sm:$0xff]
    %v82 = vld [vmem:[%s3 + $0x98] sm:$0xff]
    %v83 = vld [vmem:[%s3 + $0xa0] sm:$0xff]
    %v84 = vld [vmem:[%s3 + $0xa8] sm:$0xff]
    %v85 = vld [vmem:[%s3 + $0xb0] sm:$0xff]
    %v86 = vld [vmem:[%s3 + $0xb8] sm:$0xff]
    %v87 = vld [vmem:[%s3 + $0xc0] sm:$0xff]
    %v88 = vld [vmem:[%s3 + $0xc8] sm:$0xff]
    %v89 = vld [vmem:[%s3 + $0xd0] sm:$0xff]
    %v90 = vld [vmem:[%s3 + $0xd8] sm:$0xff]
    %v91 = vld [vmem:[%s3 + $0xe0] sm:$0xff]
    %v92 = vld [vmem:[%s3 + $0xe8] sm:$0xff]
    %v93 = vld [vmem:[%s3 + $0xf0] sm:$0xff]
    %v94 = vld [vmem:[%s3 + $0xf8] sm:$0xff]
    %96 = vset.pattern.permute.xlu0 0
    %97 = vperm.xlu0 %96, %v63
    %v98 = vpop.permute.xlu0 %97
    %101 = vset.pattern.permute.xlu0 0
    %102 = vperm.xlu0 %101, %v64
    %v103 = vpop.permute.xlu0 %102
    %106 = vset.pattern.permute.xlu0 0
    %107 = vperm.xlu0 %106, %v65
    %v108 = vpop.permute.xlu0 %107
    %111 = vset.pattern.permute.xlu0 0
    %112 = vperm.xlu0 %111, %v66
    %v113 = vpop.permute.xlu0 %112
    %116 = vset.pattern.permute.xlu0 0
    %117 = vperm.xlu0 %116, %v67
    %v118 = vpop.permute.xlu0 %117
    %121 = vset.pattern.permute.xlu0 0
    %122 = vperm.xlu0 %121, %v68
    %v123 = vpop.permute.xlu0 %122
    %126 = vset.pattern.permute.xlu0 0
    %127 = vperm.xlu0 %126, %v69
    %v128 = vpop.permute.xlu0 %127
    %131 = vset.pattern.permute.xlu0 0
    %132 = vperm.xlu0 %131, %v70
    %v133 = vpop.permute.xlu0 %132
    %136 = vset.pattern.permute.xlu0 0
    %137 = vperm.xlu0 %136, %v71
    %v138 = vpop.permute.xlu0 %137
    %141 = vset.pattern.permute.xlu0 0
    %142 = vperm.xlu0 %141, %v72
    %v143 = vpop.permute.xlu0 %142
    %146 = vset.pattern.permute.xlu0 0
    %147 = vperm.xlu0 %146, %v73
    %v148 = vpop.permute.xlu0 %147
    %151 = vset.pattern.permute.xlu0 0
    %152 = vperm.xlu0 %151, %v74
    %v153 = vpop.permute.xlu0 %152
    %156 = vset.pattern.permute.xlu0 0
    %157 = vperm.xlu0 %156, %v75
    %v158 = vpop.permute.xlu0 %157
    %161 = vset.pattern.permute.xlu0 0
    %162 = vperm.xlu0 %161, %v76
    %v163 = vpop.permute.xlu0 %162
    %166 = vset.pattern.permute.xlu0 0
    %167 = vperm.xlu0 %166, %v77
    %v168 = vpop.permute.xlu0 %167
    %171 = vset.pattern.permute.xlu0 0
    %172 = vperm.xlu0 %171, %v78
    %v173 = vpop.permute.xlu0 %172
    %176 = vset.pattern.permute.xlu0 0
    %177 = vperm.xlu0 %176, %v79
    %v178 = vpop.permute.xlu0 %177
    %181 = vset.pattern.permute.xlu0 0
    %182 = vperm.xlu0 %181, %v80
    %v183 = vpop.permute.xlu0 %182
    %186 = vset.pattern.permute.xlu0 0
    %187 = vperm.xlu0 %186, %v81
    %v188 = vpop.permute.xlu0 %187
    %191 = vset.pattern.permute.xlu0 0
    %192 = vperm.xlu0 %191, %v82
    %v193 = vpop.permute.xlu0 %192
    %196 = vset.pattern.permute.xlu0 0
    %197 = vperm.xlu0 %196, %v83
    %v198 = vpop.permute.xlu0 %197
    %201 = vset.pattern.permute.xlu0 0
    %202 = vperm.xlu0 %201, %v84
    %v203 = vpop.permute.xlu0 %202
    %206 = vset.pattern.permute.xlu0 0
    %207 = vperm.xlu0 %206, %v85
    %v208 = vpop.permute.xlu0 %207
    %211 = vset.pattern.permute.xlu0 0
    %212 = vperm.xlu0 %211, %v86
    %v213 = vpop.permute.xlu0 %212
    %216 = vset.pattern.permute.xlu0 0
    %217 = vperm.xlu0 %216, %v87
    %v218 = vpop.permute.xlu0 %217
    %221 = vset.pattern.permute.xlu0 0
    %222 = vperm.xlu0 %221, %v88
    %v223 = vpop.permute.xlu0 %222
    %226 = vset.pattern.permute.xlu0 0
    %227 = vperm.xlu0 %226, %v89
    %v228 = vpop.permute.xlu0 %227
    %231 = vset.pattern.permute.xlu0 0
    %232 = vperm.xlu0 %231, %v90
    %v233 = vpop.permute.xlu0 %232
    %236 = vset.pattern.permute.xlu0 0
    %237 = vperm.xlu0 %236, %v91
    %v238 = vpop.permute.xlu0 %237
    %241 = vset.pattern.permute.xlu0 0
    %242 = vperm.xlu0 %241, %v92
    %v243 = vpop.permute.xlu0 %242
    %246 = vset.pattern.permute.xlu0 0
    %247 = vperm.xlu0 %246, %v93
    %v248 = vpop.permute.xlu0 %247
    %251 = vset.pattern.permute.xlu0 0
    %252 = vperm.xlu0 %251, %v94
    %v253 = vpop.permute.xlu0 %252
    %vm255 = vcmask 261120
    %v257 = vsel %vm255, %v27, 0
    %v260 = vsel %vm255, %v28, 0
    %v263 = vsel %vm255, %v29, 0
    %v266 = vsel %vm255, %v30, 0
    %v269 = vsel %vm255, %v31, 0
    %v272 = vsel %vm255, %v32, 0
    %v275 = vsel %vm255, %v33, 0
    %v278 = vsel %vm255, %v34, 0
    %v281 = vsel %vm255, %v35, 0
    %v284 = vsel %vm255, %v36, 0
    %v287 = vsel %vm255, %v37, 0
    %v290 = vsel %vm255, %v38, 0
    %v293 = vsel %vm255, %v39, 0
    %v296 = vsel %vm255, %v40, 0
    %v299 = vsel %vm255, %v41, 0
    %v302 = vsel %vm255, %v42, 0
    %v305 = vsel %vm255, %v43, 0
    %v308 = vsel %vm255, %v44, 0
    %v311 = vsel %vm255, %v45, 0
    %v314 = vsel %vm255, %v46, 0
    %v317 = vsel %vm255, %v47, 0
    %v320 = vsel %vm255, %v48, 0
    %v323 = vsel %vm255, %v49, 0
    %v326 = vsel %vm255, %v50, 0
    %v329 = vsel %vm255, %v51, 0
    %v332 = vsel %vm255, %v52, 0
    %v335 = vsel %vm255, %v53, 0
    %v338 = vsel %vm255, %v54, 0
    %v341 = vsel %vm255, %v55, 0
    %v344 = vsel %vm255, %v56, 0
    %v347 = vsel %vm255, %v57, 0
    %v350 = vsel %vm255, %v58, 0
    %352 = vmatprep.subr.mxu0 0.0
    %353 = vmatpush1.msra.mxu0 %v59
    %354 = vmatprep.subr.mxu0 0.0
    %355 = vmatpush1.msra.mxu0 %v60
    %356 = vmatprep.subr.mxu0 0.0
    %357 = vmatpush1.msra.mxu0 %v61
    %358 = vmatprep.subr.mxu0 0.0
    %359 = vmatpush1.msra.mxu0 %v62
    %360 = vmatprep.subr.mxu0 0.0
    %361 = vmatpush1.msra.mxu0 0.0
    %362 = vmatprep.subr.mxu0 0.0
    %363 = vmatpush1.msra.mxu0 0.0
    %364 = vmatprep.subr.mxu0 0.0
    %365 = vmatpush1.msra.mxu0 0.0
    %366 = vmatprep.subr.mxu0 0.0
    %367 = vmatpush1.msra.mxu0 0.0
    %368 = vmatprep.subr.mxu0 0.0
    %369 = vmatpush1.msra.mxu0 0.0
    %370 = vmatprep.subr.mxu0 0.0
    %371 = vmatpush1.msra.mxu0 0.0
    %372 = vmatprep.subr.mxu0 0.0
    %373 = vmatpush1.msra.mxu0 0.0
    %374 = vmatprep.subr.mxu0 0.0
    %375 = vmatpush1.msra.mxu0 0.0
    %376 = vmatprep.subr.mxu0 0.0
    %377 = vmatpush1.msra.mxu0 0.0
    %378 = vmatprep.subr.mxu0 0.0
    %379 = vmatpush1.msra.mxu0 0.0
    %380 = vmatprep.subr.mxu0 0.0
    %381 = vmatpush1.msra.mxu0 0.0
    %382 = vmatprep.subr.mxu0 0.0
    %383 = vmatpush1.msra.mxu0 0.0
    %384 = vmatprep.subr.mxu0 0.0
    %385 = vmatpush1.msra.mxu0 0.0
    %386 = vmatprep.subr.mxu0 0.0
    %387 = vmatpush1.msra.mxu0 0.0
    %388 = vmatprep.subr.mxu0 0.0
    %389 = vmatpush1.msra.mxu0 0.0
    %390 = vmatprep.subr.mxu0 0.0
    %391 = vmatpush1.msra.mxu0 0.0
    %392 = vmatprep.subr.mxu0 0.0
    %393 = vmatpush1.msra.mxu0 0.0
    %394 = vmatprep.subr.mxu0 0.0
    %395 = vmatpush1.msra.mxu0 0.0
    %396 = vmatprep.subr.mxu0 0.0
    %397 = vmatpush1.msra.mxu0 0.0
    %398 = vmatprep.subr.mxu0 0.0
    %399 = vmatpush1.msra.mxu0 0.0
    %400 = vmatprep.subr.mxu0 0.0
    %401 = vmatpush1.msra.mxu0 0.0
    %402 = vmatprep.subr.mxu0 0.0
    %403 = vmatpush1.msra.mxu0 0.0
    %404 = vmatprep.subr.mxu0 0.0
    %405 = vmatpush1.msra.mxu0 0.0
    %406 = vmatprep.subr.mxu0 0.0
    %407 = vmatpush1.msra.mxu0 0.0
    %408 = vmatprep.subr.mxu0 0.0
    %409 = vmatpush1.msra.mxu0 0.0
    %410 = vmatprep.subr.mxu0 0.0
    %411 = vmatpush1.msra.mxu0 0.0
    %412 = vmatprep.subr.mxu0 0.0
    %413 = vmatpush1.msra.mxu0 0.0
    %414 = vmatprep.subr.mxu0 0.0
    %415 = vmatpush1.msra.mxu0 0.0
    %416 = vmatprep.mubr.f32.mxu0 0.0
    %417 = vmatmul.mubr.f32.gmra.mrb[0].mxu0 %v257
    %v418 = vpop.f32.mrb[0].mxu0
    %v419 = vadd.f32 %v98, %v418
    %v420 = vpop.f32.mrb[0].mxu0
    %421 = vmatprep.mubr.f32.mxu0 0.0
    %422 = vmatmul.mubr.f32.gmra.mrb[0].mxu0 %v260
    %v423 = vpop.f32.mrb[0].mxu0
    %v424 = vadd.f32 %v103, %v423
    %v425 = vpop.f32.mrb[0].mxu0
    %426 = vmatprep.mubr.f32.mxu0 0.0
    %427 = vmatmul.mubr.f32.gmra.mrb[0].mxu0 %v263
    %v428 = vpop.f32.mrb[0].mxu0
    %v429 = vadd.f32 %v108, %v428
    %v430 = vpop.f32.mrb[0].mxu0
    %431 = vmatprep.mubr.f32.mxu0 0.0
    %432 = vmatmul.mubr.f32.gmra.mrb[0].mxu0 %v266
    %v433 = vpop.f32.mrb[0].mxu0
    %v434 = vadd.f32 %v113, %v433
    %v435 = vpop.f32.mrb[0].mxu0
    %436 = vmatprep.mubr.f32.mxu0 0.0
    %437 = vmatmul.mubr.f32.gmra.mrb[0].mxu0 %v269
    %v438 = vpop.f32.mrb[0].mxu0
    %v439 = vadd.f32 %v118, %v438
    %v440 = vpop.f32.mrb[0].mxu0
    %441 = vmatprep.mubr.f32.mxu0 0.0
    %442 = vmatmul.mubr.f32.gmra.mrb[0].mxu0 %v272
    %v443 = vpop.f32.mrb[0].mxu0
    %v444 = vadd.f32 %v123, %v443
    %v445 = vpop.f32.mrb[0].mxu0
    %446 = vmatprep.mubr.f32.mxu0 0.0
    %447 = vmatmul.mubr.f32.gmra.mrb[0].mxu0 %v275
    %v448 = vpop.f32.mrb[0].mxu0
    %v449 = vadd.f32 %v128, %v448
    %v450 = vpop.f32.mrb[0].mxu0
    %451 = vmatprep.mubr.f32.mxu0 0.0
    %452 = vmatmul.mubr.f32.gmra.mrb[0].mxu0 %v278
    %v453 = vpop.f32.mrb[0].mxu0
    %v454 = vadd.f32 %v133, %v453
    %v455 = vpop.f32.mrb[0].mxu0
    %456 = vmatprep.mubr.f32.mxu0 0.0
    %457 = vmatmul.mubr.f32.gmra.mrb[0].mxu0 %v281
    %v458 = vpop.f32.mrb[0].mxu0
    %v459 = vadd.f32 %v138, %v458
    %v460 = vpop.f32.mrb[0].mxu0
    %461 = vmatprep.mubr.f32.mxu0 0.0
    %462 = vmatmul.mubr.f32.gmra.mrb[0].mxu0 %v284
    %v463 = vpop.f32.mrb[0].mxu0
    %v464 = vadd.f32 %v143, %v463
    %v465 = vpop.f32.mrb[0].mxu0
    %466 = vmatprep.mubr.f32.mxu0 0.0
    %467 = vmatmul.mubr.f32.gmra.mrb[0].mxu0 %v287
    %v468 = vpop.f32.mrb[0].mxu0
    %v469 = vadd.f32 %v148, %v468
    %v470 = vpop.f32.mrb[0].mxu0
    %471 = vmatprep.mubr.f32.mxu0 0.0
    %472 = vmatmul.mubr.f32.gmra.mrb[0].mxu0 %v290
    %v473 = vpop.f32.mrb[0].mxu0
    %v474 = vadd.f32 %v153, %v473
    %v475 = vpop.f32.mrb[0].mxu0
    %476 = vmatprep.mubr.f32.mxu0 0.0
    %477 = vmatmul.mubr.f32.gmra.mrb[0].mxu0 %v293
    %v478 = vpop.f32.mrb[0].mxu0
    %v479 = vadd.f32 %v158, %v478
    %v480 = vpop.f32.mrb[0].mxu0
    %481 = vmatprep.mubr.f32.mxu0 0.0
    %482 = vmatmul.mubr.f32.gmra.mrb[0].mxu0 %v296
    %v483 = vpop.f32.mrb[0].mxu0
    %v484 = vadd.f32 %v163, %v483
    %v485 = vpop.f32.mrb[0].mxu0
    %486 = vmatprep.mubr.f32.mxu0 0.0
    %487 = vmatmul.mubr.f32.gmra.mrb[0].mxu0 %v299
    %v488 = vpop.f32.mrb[0].mxu0
    %v489 = vadd.f32 %v168, %v488
    %v490 = vpop.f32.mrb[0].mxu0
    %491 = vmatprep.mubr.f32.mxu0 0.0
    %492 = vmatmul.mubr.f32.gmra.mrb[0].mxu0 %v302
    %v493 = vpop.f32.mrb[0].mxu0
    %v494 = vadd.f32 %v173, %v493
    %v495 = vpop.f32.mrb[0].mxu0
    %496 = vmatprep.mubr.f32.mxu0 0.0
    %497 = vmatmul.mubr.f32.gmra.mrb[0].mxu0 %v305
    %v498 = vpop.f32.mrb[0].mxu0
    %v499 = vadd.f32 %v178, %v498
    %v500 = vpop.f32.mrb[0].mxu0
    %501 = vmatprep.mubr.f32.mxu0 0.0
    %502 = vmatmul.mubr.f32.gmra.mrb[0].mxu0 %v308
    %v503 = vpop.f32.mrb[0].mxu0
    %v504 = vadd.f32 %v183, %v503
    %v505 = vpop.f32.mrb[0].mxu0
    %506 = vmatprep.mubr.f32.mxu0 0.0
    %507 = vmatmul.mubr.f32.gmra.mrb[0].mxu0 %v311
    %v508 = vpop.f32.mrb[0].mxu0
    %v509 = vadd.f32 %v188, %v508
    %v510 = vpop.f32.mrb[0].mxu0
    %511 = vmatprep.mubr.f32.mxu0 0.0
    %512 = vmatmul.mubr.f32.gmra.mrb[0].mxu0 %v314
    %v513 = vpop.f32.mrb[0].mxu0
    %v514 = vadd.f32 %v193, %v513
    %v515 = vpop.f32.mrb[0].mxu0
    %516 = vmatprep.mubr.f32.mxu0 0.0
    %517 = vmatmul.mubr.f32.gmra.mrb[0].mxu0 %v317
    %v518 = vpop.f32.mrb[0].mxu0
    %v519 = vadd.f32 %v198, %v518
    %v520 = vpop.f32.mrb[0].mxu0
    %521 = vmatprep.mubr.f32.mxu0 0.0
    %522 = vmatmul.mubr.f32.gmra.mrb[0].mxu0 %v320
    %v523 = vpop.f32.mrb[0].mxu0
    %v524 = vadd.f32 %v203, %v523
    %v525 = vpop.f32.mrb[0].mxu0
    %526 = vmatprep.mubr.f32.mxu0 0.0
    %527 = vmatmul.mubr.f32.gmra.mrb[0].mxu0 %v323
    %v528 = vpop.f32.mrb[0].mxu0
    %v529 = vadd.f32 %v208, %v528
    %v530 = vpop.f32.mrb[0].mxu0
    %531 = vmatprep.mubr.f32.mxu0 0.0
    %532 = vmatmul.mubr.f32.gmra.mrb[0].mxu0 %v326
    %v533 = vpop.f32.mrb[0].mxu0
    %v534 = vadd.f32 %v213, %v533
    %v535 = vpop.f32.mrb[0].mxu0
    %536 = vmatprep.mubr.f32.mxu0 0.0
    %537 = vmatmul.mubr.f32.gmra.mrb[0].mxu0 %v329
    %v538 = vpop.f32.mrb[0].mxu0
    %v539 = vadd.f32 %v218, %v538
    %v540 = vpop.f32.mrb[0].mxu0
    %541 = vmatprep.mubr.f32.mxu0 0.0
    %542 = vmatmul.mubr.f32.gmra.mrb[0].mxu0 %v332
    %v543 = vpop.f32.mrb[0].mxu0
    %v544 = vadd.f32 %v223, %v543
    %v545 = vpop.f32.mrb[0].mxu0
    %546 = vmatprep.mubr.f32.mxu0 0.0
    %547 = vmatmul.mubr.f32.gmra.mrb[0].mxu0 %v335
    %v548 = vpop.f32.mrb[0].mxu0
    %v549 = vadd.f32 %v228, %v548
    %v550 = vpop.f32.mrb[0].mxu0
    %551 = vmatprep.mubr.f32.mxu0 0.0
    %552 = vmatmul.mubr.f32.gmra.mrb[0].mxu0 %v338
    %v553 = vpop.f32.mrb[0].mxu0
    %v554 = vadd.f32 %v233, %v553
    %v555 = vpop.f32.mrb[0].mxu0
    %556 = vmatprep.mubr.f32.mxu0 0.0
    %557 = vmatmul.mubr.f32.gmra.mrb[0].mxu0 %v341
    %v558 = vpop.f32.mrb[0].mxu0
    %v559 = vadd.f32 %v238, %v558
    %v560 = vpop.f32.mrb[0].mxu0
    %561 = vmatprep.mubr.f32.mxu0 0.0
    %562 = vmatmul.mubr.f32.gmra.mrb[0].mxu0 %v344
    %v563 = vpop.f32.mrb[0].mxu0
    %v564 = vadd.f32 %v243, %v563
    %v565 = vpop.f32.mrb[0].mxu0
    %566 = vmatprep.mubr.f32.mxu0 0.0
    %567 = vmatmul.mubr.f32.gmra.mrb[0].mxu0 %v347
    %v568 = vpop.f32.mrb[0].mxu0
    %v569 = vadd.f32 %v248, %v568
    %v570 = vpop.f32.mrb[0].mxu0
    %571 = vmatprep.mubr.f32.mxu0 0.0
    %572 = vmatmul.mubr.f32.gmra.mrb[0].mxu0 %v350
    %v573 = vpop.f32.mrb[0].mxu0
    %v574 = vadd.f32 %v253, %v573
    %v575 = vpop.f32.mrb[0].mxu0
    %576 = vdwg.mxu0
    %v577 = vmax.f32 %v419, 0.0
    %v578 = vmax.f32 %v424, 0.0
    %v579 = vmax.f32 %v429, 0.0
    %v580 = vmax.f32 %v434, 0.0
    %v581 = vmax.f32 %v439, 0.0
    %v582 = vmax.f32 %v444, 0.0
    %v583 = vmax.f32 %v449, 0.0
    %v584 = vmax.f32 %v454, 0.0
    %v585 = vmax.f32 %v459, 0.0
    %v586 = vmax.f32 %v464, 0.0
    %v587 = vmax.f32 %v469, 0.0
    %v588 = vmax.f32 %v474, 0.0
    %v589 = vmax.f32 %v479, 0.0
    %v590 = vmax.f32 %v484, 0.0
    %v591 = vmax.f32 %v489, 0.0
    %v592 = vmax.f32 %v494, 0.0
    %v593 = vmax.f32 %v499, 0.0
    %v594 = vmax.f32 %v504, 0.0
    %v595 = vmax.f32 %v509, 0.0
    %v596 = vmax.f32 %v514, 0.0
    %v597 = vmax.f32 %v519, 0.0
    %v598 = vmax.f32 %v524, 0.0
    %v599 = vmax.f32 %v529, 0.0
    %v600 = vmax.f32 %v534, 0.0
    %v601 = vmax.f32 %v539, 0.0
    %v602 = vmax.f32 %v544, 0.0
    %v603 = vmax.f32 %v549, 0.0
    %v604 = vmax.f32 %v554, 0.0
    %v605 = vmax.f32 %v559, 0.0
    %v606 = vmax.f32 %v564, 0.0
    %v607 = vmax.f32 %v569, 0.0
    %v608 = vmax.f32 %v574, 0.0
    %v609 = vld [vmem:[%s4] sm:$0xff]
    %v610 = vld [vmem:[%s4 + $0x8] sm:$0xff]
    %v611 = vld [vmem:[%s4 + $0x10] sm:$0xff]
    %v612 = vld [vmem:[%s4 + $0x18] sm:$0xff]
    %v613 = vld [vmem:[%s5] sm:$0xff]
    %v614 = vld [vmem:[%s5 + $0x8] sm:$0xff]
    %616 = vset.pattern.permute.xlu0 0
    %617 = vperm.xlu0 %616, %v613
    %v618 = vpop.permute.xlu0 %617
    %621 = vset.pattern.permute.xlu0 0
    %622 = vperm.xlu0 %621, %v614
    %v623 = vpop.permute.xlu0 %622
    %625 = vmatprep.subr.mxu0 0.0
    %626 = vmatpush1.msra.mxu0 %v577
    %627 = vmatprep.subr.mxu0 0.0
    %628 = vmatpush1.msra.mxu0 %v578
    %629 = vmatprep.subr.mxu0 0.0
    %630 = vmatpush1.msra.mxu0 %v579
    %631 = vmatprep.subr.mxu0 0.0
    %632 = vmatpush1.msra.mxu0 %v580
    %633 = vmatprep.subr.mxu0 0.0
    %634 = vmatpush1.msra.mxu0 %v581
    %635 = vmatprep.subr.mxu0 0.0
    %636 = vmatpush1.msra.mxu0 %v582
    %637 = vmatprep.subr.mxu0 0.0
    %638 = vmatpush1.msra.mxu0 %v583
    %639 = vmatprep.subr.mxu0 0.0
    %640 = vmatpush1.msra.mxu0 %v584
    %641 = vmatprep.subr.mxu0 0.0
    %642 = vmatpush1.msra.mxu0 %v585
    %643 = vmatprep.subr.mxu0 0.0
    %644 = vmatpush1.msra.mxu0 %v586
    %645 = vmatprep.subr.mxu0 0.0
    %646 = vmatpush1.msra.mxu0 %v587
    %647 = vmatprep.subr.mxu0 0.0
    %648 = vmatpush1.msra.mxu0 %v588
    %649 = vmatprep.subr.mxu0 0.0
    %650 = vmatpush1.msra.mxu0 %v589
    %651 = vmatprep.subr.mxu0 0.0
    %652 = vmatpush1.msra.mxu0 %v590
    %653 = vmatprep.subr.mxu0 0.0
    %654 = vmatpush1.msra.mxu0 %v591
    %655 = vmatprep.subr.mxu0 0.0
    %656 = vmatpush1.msra.mxu0 %v592
    %657 = vmatprep.subr.mxu0 0.0
    %658 = vmatpush1.msra.mxu0 %v593
    %659 = vmatprep.subr.mxu0 0.0
    %660 = vmatpush1.msra.mxu0 %v594
    %661 = vmatprep.subr.mxu0 0.0
    %662 = vmatpush1.msra.mxu0 %v595
    %663 = vmatprep.subr.mxu0 0.0
    %664 = vmatpush1.msra.mxu0 %v596
    %665 = vmatprep.subr.mxu0 0.0
    %666 = vmatpush1.msra.mxu0 %v597
    %667 = vmatprep.subr.mxu0 0.0
    %668 = vmatpush1.msra.mxu0 %v598
    %669 = vmatprep.subr.mxu0 0.0
    %670 = vmatpush1.msra.mxu0 %v599
    %671 = vmatprep.subr.mxu0 0.0
    %672 = vmatpush1.msra.mxu0 %v600
    %673 = vmatprep.subr.mxu0 0.0
    %674 = vmatpush1.msra.mxu0 %v601
    %675 = vmatprep.subr.mxu0 0.0
    %676 = vmatpush1.msra.mxu0 %v602
    %677 = vmatprep.subr.mxu0 0.0
    %678 = vmatpush1.msra.mxu0 %v603
    %679 = vmatprep.subr.mxu0 0.0
    %680 = vmatpush1.msra.mxu0 %v604
    %681 = vmatprep.subr.mxu0 0.0
    %682 = vmatpush1.msra.mxu0 %v605
    %683 = vmatprep.subr.mxu0 0.0
    %684 = vmatpush1.msra.mxu0 %v606
    %685 = vmatprep.subr.mxu0 0.0
    %686 = vmatpush1.msra.mxu0 %v607
    %687 = vmatprep.subr.mxu0 0.0
    %688 = vmatpush1.msra.mxu0 %v608
    %689 = vmatprep.mubr.f32.mxu0 %v610
    %690 = vmatmul.mubr.f32.gmra.mrb[0].mxu0 %v609
    %v691 = vpop.f32.mrb[0].mxu0
    %v692 = vadd.f32 %v618, %v691
    %v693 = vpop.f32.mrb[0].mxu0
    %694 = vmatprep.mubr.f32.mxu0 %v612
    %695 = vmatmul.mubr.f32.gmra.mrb[0].mxu0 %v611
    %v696 = vpop.f32.mrb[0].mxu0
    %v697 = vadd.f32 %v623, %v696
    %v698 = vpop.f32.mrb[0].mxu0
    %699 = vdwg.mxu0
    %v700 = vmax.f32 %v697, 0.0
    %v701 = vand.u32 2147483647, %v697
    %v702 = vsub.f32 0.0, %v701
    %v703 = vmul.f32 %v702, 1.442695
    %v704 = vpow.pop %v703
    %v705 = vadd.f32 %v704, 1.0
    %v706 = vlog2.pop %v705
    %v707 = vmul.f32 %v706, 0.6931472
    %v708 = vmul.f32 -0.5, %v704
    %v709 = vadd.f32 %v708, 1.0
    %v710 = vmul.f32 %v709, %v704
    %v711 = vand.u32 2147483647, %v704
    %vm712 = vcmp.lt.f32.partialorder %v711, 0.0004427343
    %v713 = vsel %vm712, %v710, %v707
    %v714 = vadd.f32 %v700, %v713
    %v715 = vld [vmem:[%s1] sm:$0xf]
    %v716 = vmul.f32 %v714, %v715
    %v717 = vadd.f32 %v692, %v716
    %v718 = vmul.f32 %v715, -0.5
    %v719 = vmul.f32 %v718, %v715
    %v720 = vlog2.pop %v714
    %v721 = vmul.f32 %v720, 0.6931472
    %v722 = vsub.f32 %v719, %v721
    %v723 = vsub.f32 %v722, 0.9189385
    %v724 = vtanh.pop %v717
    %v725 = vmul.f32 %v724, %v724
    %v726 = vsub.f32 1.0, %v725
    %v727 = vadd.f32 %v726, 1e-07
    %v728 = vlog2.pop %v727
    %v729 = vmul.f32 %v728, 0.6931472
    %v730 = vsub.f32 %v723, %v729
    %vm731 = vcmask 60416
    %732 = vst.msk [vmem:[#allocation2] sm:$0xf] %vm731, %v724
    %733 = vst.msk [vmem:[#allocation4] sm:$0xf] %vm731, %v730
    // Predicated region
    $region26: #{tpu_custom_call.1} parent=1 // pred_check
      _
    $region27: #{tpu_custom_call.1} parent=1 // pred_check_branch
      %735 = sbr.rel (0) target = $region29
    $region28: #{tpu_custom_call.1} parent=1 // pred_region
      %s737 = ssub.s32 64, 64
      %738 = vsyncadd [#allocation3], %s737
      %s740 = sshll.u32 [#allocation2], 4
      %s741 = int_to_ptr.vmem [resolvable:$true] %s740
      %743 = dma.vmem_to_hbm [thread:$0]  %s741, 64, %s6, [#allocation3]
    $region29: #{tpu_custom_call.1} parent=1 // pred_fallthru
      _
    // Predicated region
    $region30: #{tpu_custom_call.1} parent=1 // pred_check
      _
    $region31: #{tpu_custom_call.1} parent=1 // pred_check_branch
      %745 = sbr.rel (0) target = $region33
    $region32: #{tpu_custom_call.1} parent=1 // pred_region
      %s747 = ssub.s32 64, 64
      %748 = vsyncadd [#allocation5], %s747
      %s750 = sshll.u32 [#allocation4], 4
      %s751 = int_to_ptr.vmem [resolvable:$true] %s750
      %753 = dma.vmem_to_hbm [thread:$0]  %s751, 64, %s7, [#allocation5]
    $region33: #{tpu_custom_call.1} parent=1 // pred_fallthru
      _
    // Predicated region
    $region34: #{tpu_custom_call.1} parent=1 // pred_check
      _
    $region35: #{tpu_custom_call.1} parent=1 // pred_check_branch
      %755 = sbr.rel (0) target = $region37
    $region36: #{tpu_custom_call.1} parent=1 // pred_region
      %756 = dma.done [#allocation3], 64
    $region37: #{tpu_custom_call.1} parent=1 // pred_fallthru
      _
    // Predicated region
    $region38: #{tpu_custom_call.1} parent=1 // pred_check
      _
    $region39: #{tpu_custom_call.1} parent=1 // pred_check_branch
      %758 = sbr.rel (0) target = $region41
    $region40: #{tpu_custom_call.1} parent=1 // pred_region
      %759 = dma.done [#allocation5], 64
    $region41: #{tpu_custom_call.1} parent=1 // pred_fallthru
      _
    %760 = vsyncpa [#allocation3], 1
    %761 = vsyncpa [#allocation5], 1

</llo_original>
